<compile_context>
chip_gen: v7x
topology: tpu7x:2x2x1
jax: 0.10.0
libtpu: 0.0.40
codegen_flags: <defaults>
</compile_context>

<pallas_src>
import functools

import jax
import jax.numpy as jnp
from jax.experimental import pallas as pl
from jax.experimental.pallas import tpu as pltpu


LN_EPS = 1e-5  # torch.nn.LayerNorm default


def _layernorm(h, gamma, beta):
    """LayerNorm over the last axis, f32 math."""
    mu = jnp.mean(h, axis=-1, keepdims=True)
    var = jnp.mean((h - mu) * (h - mu), axis=-1, keepdims=True)
    return (h - mu) * jax.lax.rsqrt(var + LN_EPS) * gamma + beta


def clinical_prior_encoder_kernel(
    prior_ref,
    w1_ref, b1_ref, g1_ref, be1_ref,
    w2_ref, b2_ref, g2_ref, be2_ref,
    w3_ref, b3_ref, g3_ref, be3_ref,
    out_ref,
):
    # NOTE: on the ragged tail tile the padding rows hold garbage; the
    # LayerNorm / rsqrt below runs over them harmlessly (no traps on TPU) and
    # the clipped store never writes them back. Do NOT "fix" this with a mask.
    x = prior_ref[...]                 # [TB, P]
    p_dim = x.shape[-1]                # static (3)

    # --- block 1: Linear(P, H) + LN + ReLU (+ Dropout == id) -----------------
    # K=3 is hopeless for the MXU (pads to full MXU K + layout shuffle), so do
    # it as P broadcast FMAs on the VPU instead. Cast hoisted out of the loop.
    xf = x.astype(jnp.float32)
    w1 = w1_ref[...]                   # [P, H] f32
    h = xf[:, 0:1] * w1[0:1, :]
    for k in range(1, p_dim):
        h = h + xf[:, k:k + 1] * w1[k:k + 1, :]
    h = h + b1_ref[...]
    h = _layernorm(h, g1_ref[...], be1_ref[...])
    h = jnp.maximum(h, 0.0)

    # --- block 2: Linear(H, 2H) + LN + ReLU (+ Dropout == id) --- (MXU) ------
    # Matmul operands follow the (pre-cast, typically bf16) weight dtype;
    # accumulation is f32; LN/ReLU stay f32.
    h = jnp.dot(h.astype(w2_ref.dtype), w2_ref[...],
                preferred_element_type=jnp.float32) + b2_ref[...]
    h = _layernorm(h, g2_ref[...], be2_ref[...])
    h = jnp.maximum(h, 0.0)

    # --- block 3: Linear(2H, D) + LN --- (MXU) --------------------------------
    h = jnp.dot(h.astype(w3_ref.dtype), w3_ref[...],
                preferred_element_type=jnp.float32) + b3_ref[...]
    h = _layernorm(h, g3_ref[...], be3_ref[...])

    out_ref[...] = h.astype(out_ref.dtype)


def prepare_params(params, matmul_dtype=jnp.bfloat16):
    """Cast the two MXU weight matrices ONCE, outside the jitted call path.

    bf16 is the native MXU dtype on v5e/v6e/v7x (f32 runs multi-pass); the
    LayerNorm right after each matmul re-normalizes, bounding accuracy impact.
    Pass matmul_dtype=jnp.float32 for bit-level fidelity vs the reference.
    """
    (w1, b1, g1, be1, w2, b2, g2, be2, w3, b3, g3, be3) = params
    return (w1, b1, g1, be1,
            w2.astype(matmul_dtype), b2, g2, be2,
            w3.astype(matmul_dtype), b3, g3, be3)


@functools.partial(jax.jit, static_argnames=("block_b", "out_dtype"))
def clinical_prior_encoder(prior, params, *, block_b=2048, out_dtype=jnp.float32):
    """prior: [B, prior_dim] -> [B, output_dim].

    params:   output of prepare_params() (weights already in matmul dtype).
    block_b:  batch tile (rows per grid step); multiple of 8. Large tiles
              amortize the ~0.35 us/step grid overhead; working set is only
              ~15-20 MB even at 2048 rows.
    out_dtype: output dtype. bf16 halves output writeback (the exposed HBM
              cost on v5e/v6e) if downstream accepts it; default f32 matches
              the PyTorch module.
    """
    (w1, b1, g1, be1, w2, b2, g2, be2, w3, b3, g3, be3) = params
    B, P = prior.shape
    H = w1.shape[1]
    H2 = w2.shape[1]
    D = w3.shape[1]

    # Batch tile: either the whole (possibly unaligned) batch in one block, or
    # a multiple-of-8 tile with Pallas handling the ragged tail block.
    if B <= block_b:
        tb = B
    else:
        assert block_b % 8 == 0, "block_b must be a multiple of 8"
        tb = block_b
    grid = (pl.cdiv(B, tb),)

    row_spec = lambda dim: pl.BlockSpec((tb, dim), lambda i: (i, 0))
    # Constant index_map -> weights/biases stay resident in VMEM across steps.
    const_spec = lambda arr: pl.BlockSpec(arr.shape, lambda i: (0, 0))

    in_specs = [row_spec(P)] + [const_spec(p) for p in params]
    out_spec = row_spec(D)

    param_bytes = sum(int(p.size) * p.dtype.itemsize for p in params)
    cost = pl.CostEstimate(
        flops=2 * B * (P * H + H * H2 + H2 * D),
        transcendentals=3 * B,  # one rsqrt per LayerNorm row
        bytes_accessed=B * P * prior.dtype.itemsize
        + B * D * jnp.dtype(out_dtype).itemsize
        + param_bytes,
    )

    return pl.pallas_call(
        clinical_prior_encoder_kernel,
        out_shape=jax.ShapeDtypeStruct((B, D), out_dtype),
        grid=grid,
        in_specs=in_specs,
        out_specs=out_spec,
        compiler_params=pltpu.CompilerParams(
            # TODO(synk): on v7x confirm the batch axis splits across both TCs;
            # switch to pltpu.CORE_PARALLEL if the profile shows one TC idle.
            dimension_semantics=("parallel",),
            # Raise scoped VMEM so TB>=1024 f32 output double-buffers fit on
            # v5e (16 MiB default) / v6e (32 MiB); stays under v7x's 64 MiB.
            vmem_limit_bytes=48 << 20,
        ),
        cost_estimate=cost,
    )(prior, *params)


def init_params(key, prior_dim=3, hidden_dim=128, output_dim=384):
    """Deterministic init matching the module's _init_weights:
    Linear weights xavier_uniform, Linear biases 0, LN weight 1, LN bias 0."""
    def xavier(key, fan_in, fan_out):
        bound = (6.0 / (fan_in + fan_out)) ** 0.5
        # stored as [in, out] so the kernel does x @ W
        return jax.random.uniform(
            key, (fan_in, fan_out), jnp.float32, minval=-bound, maxval=bound
        )

    k1, k2, k3 = jax.random.split(key, 3)
    h2 = hidden_dim * 2

    w1 = xavier(k1, prior_dim, hidden_dim)
    b1 = jnp.zeros((1, hidden_dim), jnp.float32)
    g1 = jnp.ones((1, hidden_dim), jnp.float32)
    be1 = jnp.zeros((1, hidden_dim), jnp.float32)

    w2 = xavier(k2, hidden_dim, h2)
    b2 = jnp.zeros((1, h2), jnp.float32)
    g2 = jnp.ones((1, h2), jnp.float32)
    be2 = jnp.zeros((1, h2), jnp.float32)

    w3 = xavier(k3, h2, output_dim)
    b3 = jnp.zeros((1, output_dim), jnp.float32)
    g3 = jnp.ones((1, output_dim), jnp.float32)
    be3 = jnp.zeros((1, output_dim), jnp.float32)

    return (w1, b1, g1, be1, w2, b2, g2, be2, w3, b3, g3, be3)


def _reference(prior, params):
    """Pure-JAX reference (f32 params) for sanity checking."""
    (w1, b1, g1, be1, w2, b2, g2, be2, w3, b3, g3, be3) = params
    h = prior @ w1 + b1
    h = jnp.maximum(_layernorm(h, g1, be1), 0.0)
    h = h @ w2 + b2
    h = jnp.maximum(_layernorm(h, g2, be2), 0.0)
    h = h @ w3 + b3
    return _layernorm(h, g3, be3)


if __name__ == "__main__":
    PRIOR_DIM, HIDDEN_DIM, OUTPUT_DIM = 3, 128, 384

    key = jax.random.PRNGKey(0)
    k_params, k_prior = jax.random.split(key)
    params_f32 = init_params(k_params, PRIOR_DIM, HIDDEN_DIM, OUTPUT_DIM)

    # Pre-cast once, outside the jit'd call path.
    params_exact = prepare_params(params_f32, matmul_dtype=jnp.float32)
    params_fast = prepare_params(params_f32, matmul_dtype=jnp.bfloat16)  # default

    # --- small single-block case (B=8), f32 matmuls: bit-level fidelity ------
    prior_small = jax.random.normal(k_prior, (8, PRIOR_DIM), jnp.float32)
    out_small = jax.block_until_ready(
        clinical_prior_encoder(prior_small, params_exact))
    ref_small = _reference(prior_small, params_f32)
    assert out_small.shape == (8, OUTPUT_DIM), out_small.shape
    assert jnp.allclose(out_small, ref_small, atol=1e-4, rtol=1e-4), \
        "mismatch vs JAX reference (small, f32)"

    # --- multi-block case with ragged tail (B=520, TB=256), f32 matmuls ------
    prior_big = jax.random.normal(jax.random.PRNGKey(1), (520, PRIOR_DIM),
                                  jnp.float32)
    out_big = jax.block_until_ready(
        clinical_prior_encoder(prior_big, params_exact, block_b=256))
    ref_big = _reference(prior_big, params_f32)
    assert out_big.shape == (520, OUTPUT_DIM), out_big.shape
    assert jnp.allclose(out_big, ref_big, atol=1e-4, rtol=1e-4), \
        "mismatch vs JAX reference (gridded, f32)"

    # --- default bf16-matmul fast path — looser tolerance vs f32 reference ---
    out_bf16 = jax.block_until_ready(
        clinical_prior_encoder(prior_big, params_fast, block_b=256))
    assert out_bf16.shape == (520, OUTPUT_DIM), out_bf16.shape
    assert jnp.allclose(out_bf16, ref_big, atol=1e-1, rtol=1e-1), \
        "mismatch vs JAX reference (gridded, bf16 matmuls)"

    # --- bf16 output store path (recommended on v5e/v6e) ---------------------
    out_bf16_store = jax.block_until_ready(
        clinical_prior_encoder(prior_big, params_fast, block_b=256,
                               out_dtype=jnp.bfloat16))
    assert out_bf16_store.shape == (520, OUTPUT_DIM)
    assert out_bf16_store.dtype == jnp.bfloat16
    assert jnp.allclose(out_bf16_store.astype(jnp.float32), ref_big,
                        atol=2e-1, rtol=2e-1), \
        "mismatch vs JAX reference (bf16 output)"

    print("KERNEL_OK")
</pallas_src>

<mosaic_0001>
module attributes {stable_mosaic.version = 11 : i64} {
  func.func @clinical_prior_encoder_kernel(%arg0: i32, %arg1: memref<8x3xf32, #tpu.memory_space<vmem>>, %arg2: memref<3x128xf32, #tpu.memory_space<vmem>>, %arg3: memref<1x128xf32, #tpu.memory_space<vmem>>, %arg4: memref<1x128xf32, #tpu.memory_space<vmem>>, %arg5: memref<1x128xf32, #tpu.memory_space<vmem>>, %arg6: memref<128x256xf32, #tpu.memory_space<vmem>>, %arg7: memref<1x256xf32, #tpu.memory_space<vmem>>, %arg8: memref<1x256xf32, #tpu.memory_space<vmem>>, %arg9: memref<1x256xf32, #tpu.memory_space<vmem>>, %arg10: memref<256x384xf32, #tpu.memory_space<vmem>>, %arg11: memref<1x384xf32, #tpu.memory_space<vmem>>, %arg12: memref<1x384xf32, #tpu.memory_space<vmem>>, %arg13: memref<1x384xf32, #tpu.memory_space<vmem>>, %arg14: memref<8x384xf32, #tpu.memory_space<vmem>>) attributes {dimension_semantics = [#tpu.dimension_semantics<parallel>], iteration_bounds = array<i64: 1>, scalar_prefetch = 0 : i64, scratch_operands = 0 : i64, tpu.core_type = #tpu.core_type<tc>, window_params = [{transform_indices = @transform_0, window_bounds = array<i64: 8, 3>}, {pipeline_mode = #tpu.pipeline_mode<synchronous>, transform_indices = @transform_1, window_bounds = array<i64: 3, 128>}, {pipeline_mode = #tpu.pipeline_mode<synchronous>, transform_indices = @transform_2, window_bounds = array<i64: 1, 128>}, {pipeline_mode = #tpu.pipeline_mode<synchronous>, transform_indices = @transform_3, window_bounds = array<i64: 1, 128>}, {pipeline_mode = #tpu.pipeline_mode<synchronous>, transform_indices = @transform_4, window_bounds = array<i64: 1, 128>}, {pipeline_mode = #tpu.pipeline_mode<synchronous>, transform_indices = @transform_5, window_bounds = array<i64: 128, 256>}, {pipeline_mode = #tpu.pipeline_mode<synchronous>, transform_indices = @transform_6, window_bounds = array<i64: 1, 256>}, {pipeline_mode = #tpu.pipeline_mode<synchronous>, transform_indices = @transform_7, window_bounds = array<i64: 1, 256>}, {pipeline_mode = #tpu.pipeline_mode<synchronous>, transform_indices = @transform_8, window_bounds = array<i64: 1, 256>}, {pipeline_mode = #tpu.pipeline_mode<synchronous>, transform_indices = @transform_9, window_bounds = array<i64: 256, 384>}, {pipeline_mode = #tpu.pipeline_mode<synchronous>, transform_indices = @transform_10, window_bounds = array<i64: 1, 384>}, {pipeline_mode = #tpu.pipeline_mode<synchronous>, transform_indices = @transform_11, window_bounds = array<i64: 1, 384>}, {pipeline_mode = #tpu.pipeline_mode<synchronous>, transform_indices = @transform_12, window_bounds = array<i64: 1, 384>}, {transform_indices = @transform_13, window_bounds = array<i64: 8, 384>}]} {
    %c0 = arith.constant 0 : index
    %c0_0 = arith.constant 0 : index
    %0 = vector.load %arg1[%c0, %c0_0] : memref<8x3xf32, #tpu.memory_space<vmem>>, vector<8x3xf32>
    %c0_1 = arith.constant 0 : index
    %c0_2 = arith.constant 0 : index
    %1 = vector.load %arg2[%c0_1, %c0_2] : memref<3x128xf32, #tpu.memory_space<vmem>>, vector<3x128xf32>
    %2 = vector.extract_strided_slice %0 {offsets = [0, 0], sizes = [8, 1], strides = [1, 1]} : vector<8x3xf32> to vector<8x1xf32>
    %3 = vector.extract_strided_slice %1 {offsets = [0, 0], sizes = [1, 128], strides = [1, 1]} : vector<3x128xf32> to vector<1x128xf32>
    %4 = vector.broadcast %2 : vector<8x1xf32> to vector<8x128xf32>
    %5 = vector.broadcast %3 : vector<1x128xf32> to vector<8x128xf32>
    %6 = arith.mulf %4, %5 : vector<8x128xf32>
    %7 = vector.extract_strided_slice %0 {offsets = [0, 1], sizes = [8, 1], strides = [1, 1]} : vector<8x3xf32> to vector<8x1xf32>
    %8 = vector.extract_strided_slice %1 {offsets = [1, 0], sizes = [1, 128], strides = [1, 1]} : vector<3x128xf32> to vector<1x128xf32>
    %9 = vector.broadcast %7 : vector<8x1xf32> to vector<8x128xf32>
    %10 = vector.broadcast %8 : vector<1x128xf32> to vector<8x128xf32>
    %11 = arith.mulf %9, %10 : vector<8x128xf32>
    %12 = arith.addf %6, %11 : vector<8x128xf32>
    %13 = vector.extract_strided_slice %0 {offsets = [0, 2], sizes = [8, 1], strides = [1, 1]} : vector<8x3xf32> to vector<8x1xf32>
    %14 = vector.extract_strided_slice %1 {offsets = [2, 0], sizes = [1, 128], strides = [1, 1]} : vector<3x128xf32> to vector<1x128xf32>
    %15 = vector.broadcast %13 : vector<8x1xf32> to vector<8x128xf32>
    %16 = vector.broadcast %14 : vector<1x128xf32> to vector<8x128xf32>
    %17 = arith.mulf %15, %16 : vector<8x128xf32>
    %18 = arith.addf %12, %17 : vector<8x128xf32>
    %c0_3 = arith.constant 0 : index
    %c0_4 = arith.constant 0 : index
    %19 = vector.load %arg3[%c0_3, %c0_4] : memref<1x128xf32, #tpu.memory_space<vmem>>, vector<1x128xf32>
    %20 = vector.broadcast %19 : vector<1x128xf32> to vector<8x128xf32>
    %21 = arith.addf %18, %20 : vector<8x128xf32>
    %c0_5 = arith.constant 0 : index
    %c0_6 = arith.constant 0 : index
    %22 = vector.load %arg4[%c0_5, %c0_6] : memref<1x128xf32, #tpu.memory_space<vmem>>, vector<1x128xf32>
    %c0_7 = arith.constant 0 : index
    %c0_8 = arith.constant 0 : index
    %23 = vector.load %arg5[%c0_7, %c0_8] : memref<1x128xf32, #tpu.memory_space<vmem>>, vector<1x128xf32>
    %cst = arith.constant dense<0.000000e+00> : vector<8xf32>
    %24 = vector.multi_reduction <add>, %21, %cst [1] : vector<8x128xf32> to vector<8xf32>
    %25 = vector.shape_cast %24 : vector<8xf32> to vector<8x1xf32>
    %cst_9 = arith.constant 1.280000e+02 : f32
    %26 = vector.broadcast %cst_9 : f32 to vector<8x1xf32>
    %27 = arith.divf %25, %26 : vector<8x1xf32>
    %28 = vector.broadcast %27 : vector<8x1xf32> to vector<8x128xf32>
    %29 = arith.subf %21, %28 : vector<8x128xf32>
    %30 = vector.broadcast %27 : vector<8x1xf32> to vector<8x128xf32>
    %31 = arith.subf %21, %30 : vector<8x128xf32>
    %32 = arith.mulf %29, %31 : vector<8x128xf32>
    %cst_10 = arith.constant dense<0.000000e+00> : vector<8xf32>
    %33 = vector.multi_reduction <add>, %32, %cst_10 [1] : vector<8x128xf32> to vector<8xf32>
    %34 = vector.shape_cast %33 : vector<8xf32> to vector<8x1xf32>
    %cst_11 = arith.constant 1.280000e+02 : f32
    %35 = vector.broadcast %cst_11 : f32 to vector<8x1xf32>
    %36 = arith.divf %34, %35 : vector<8x1xf32>
    %37 = vector.broadcast %27 : vector<8x1xf32> to vector<8x128xf32>
    %38 = arith.subf %21, %37 : vector<8x128xf32>
    %cst_12 = arith.constant 9.99999974E-6 : f32
    %39 = vector.broadcast %cst_12 : f32 to vector<8x1xf32>
    %40 = arith.addf %36, %39 : vector<8x1xf32>
    %41 = math.rsqrt %40 : vector<8x1xf32>
    %42 = vector.broadcast %41 : vector<8x1xf32> to vector<8x128xf32>
    %43 = arith.mulf %38, %42 : vector<8x128xf32>
    %44 = vector.broadcast %22 : vector<1x128xf32> to vector<8x128xf32>
    %45 = arith.mulf %43, %44 : vector<8x128xf32>
    %46 = vector.broadcast %23 : vector<1x128xf32> to vector<8x128xf32>
    %47 = arith.addf %45, %46 : vector<8x128xf32>
    %cst_13 = arith.constant 0.000000e+00 : f32
    %48 = vector.broadcast %cst_13 : f32 to vector<8x128xf32>
    %49 = arith.maximumf %47, %48 : vector<8x128xf32>
    %c0_14 = arith.constant 0 : index
    %c0_15 = arith.constant 0 : index
    %50 = vector.load %arg6[%c0_14, %c0_15] : memref<128x256xf32, #tpu.memory_space<vmem>>, vector<128x256xf32>
    %cst_16 = arith.constant dense<0.000000e+00> : vector<8x256xf32>
    %51 = tpu.matmul %49, %50, %cst_16 {dimension_numbers = #tpu.dot_dimension_numbers<[1], [0], [0], [1], [0, 0, 1, 1], [], []>} : vector<8x128xf32>, vector<128x256xf32>, vector<8x256xf32> -> vector<8x256xf32>
    %c0_17 = arith.constant 0 : index
    %c0_18 = arith.constant 0 : index
    %52 = vector.load %arg7[%c0_17, %c0_18] : memref<1x256xf32, #tpu.memory_space<vmem>>, vector<1x256xf32>
    %53 = vector.broadcast %52 : vector<1x256xf32> to vector<8x256xf32>
    %54 = arith.addf %51, %53 : vector<8x256xf32>
    %c0_19 = arith.constant 0 : index
    %c0_20 = arith.constant 0 : index
    %55 = vector.load %arg8[%c0_19, %c0_20] : memref<1x256xf32, #tpu.memory_space<vmem>>, vector<1x256xf32>
    %c0_21 = arith.constant 0 : index
    %c0_22 = arith.constant 0 : index
    %56 = vector.load %arg9[%c0_21, %c0_22] : memref<1x256xf32, #tpu.memory_space<vmem>>, vector<1x256xf32>
    %cst_23 = arith.constant dense<0.000000e+00> : vector<8xf32>
    %57 = vector.multi_reduction <add>, %54, %cst_23 [1] : vector<8x256xf32> to vector<8xf32>
    %58 = vector.shape_cast %57 : vector<8xf32> to vector<8x1xf32>
    %cst_24 = arith.constant 2.560000e+02 : f32
    %59 = vector.broadcast %cst_24 : f32 to vector<8x1xf32>
    %60 = arith.divf %58, %59 : vector<8x1xf32>
    %61 = vector.broadcast %60 : vector<8x1xf32> to vector<8x256xf32>
    %62 = arith.subf %54, %61 : vector<8x256xf32>
    %63 = vector.broadcast %60 : vector<8x1xf32> to vector<8x256xf32>
    %64 = arith.subf %54, %63 : vector<8x256xf32>
    %65 = arith.mulf %62, %64 : vector<8x256xf32>
    %cst_25 = arith.constant dense<0.000000e+00> : vector<8xf32>
    %66 = vector.multi_reduction <add>, %65, %cst_25 [1] : vector<8x256xf32> to vector<8xf32>
    %67 = vector.shape_cast %66 : vector<8xf32> to vector<8x1xf32>
    %cst_26 = arith.constant 2.560000e+02 : f32
    %68 = vector.broadcast %cst_26 : f32 to vector<8x1xf32>
    %69 = arith.divf %67, %68 : vector<8x1xf32>
    %70 = vector.broadcast %60 : vector<8x1xf32> to vector<8x256xf32>
    %71 = arith.subf %54, %70 : vector<8x256xf32>
    %cst_27 = arith.constant 9.99999974E-6 : f32
    %72 = vector.broadcast %cst_27 : f32 to vector<8x1xf32>
    %73 = arith.addf %69, %72 : vector<8x1xf32>
    %74 = math.rsqrt %73 : vector<8x1xf32>
    %75 = vector.broadcast %74 : vector<8x1xf32> to vector<8x256xf32>
    %76 = arith.mulf %71, %75 : vector<8x256xf32>
    %77 = vector.broadcast %55 : vector<1x256xf32> to vector<8x256xf32>
    %78 = arith.mulf %76, %77 : vector<8x256xf32>
    %79 = vector.broadcast %56 : vector<1x256xf32> to vector<8x256xf32>
    %80 = arith.addf %78, %79 : vector<8x256xf32>
    %cst_28 = arith.constant 0.000000e+00 : f32
    %81 = vector.broadcast %cst_28 : f32 to vector<8x256xf32>
    %82 = arith.maximumf %80, %81 : vector<8x256xf32>
    %c0_29 = arith.constant 0 : index
    %c0_30 = arith.constant 0 : index
    %83 = vector.load %arg10[%c0_29, %c0_30] : memref<256x384xf32, #tpu.memory_space<vmem>>, vector<256x384xf32>
    %cst_31 = arith.constant dense<0.000000e+00> : vector<8x384xf32>
    %84 = tpu.matmul %82, %83, %cst_31 {dimension_numbers = #tpu.dot_dimension_numbers<[1], [0], [0], [1], [0, 0, 1, 1], [], []>} : vector<8x256xf32>, vector<256x384xf32>, vector<8x384xf32> -> vector<8x384xf32>
    %c0_32 = arith.constant 0 : index
    %c0_33 = arith.constant 0 : index
    %85 = vector.load %arg11[%c0_32, %c0_33] : memref<1x384xf32, #tpu.memory_space<vmem>>, vector<1x384xf32>
    %86 = vector.broadcast %85 : vector<1x384xf32> to vector<8x384xf32>
    %87 = arith.addf %84, %86 : vector<8x384xf32>
    %c0_34 = arith.constant 0 : index
    %c0_35 = arith.constant 0 : index
    %88 = vector.load %arg12[%c0_34, %c0_35] : memref<1x384xf32, #tpu.memory_space<vmem>>, vector<1x384xf32>
    %c0_36 = arith.constant 0 : index
    %c0_37 = arith.constant 0 : index
    %89 = vector.load %arg13[%c0_36, %c0_37] : memref<1x384xf32, #tpu.memory_space<vmem>>, vector<1x384xf32>
    %cst_38 = arith.constant dense<0.000000e+00> : vector<8xf32>
    %90 = vector.multi_reduction <add>, %87, %cst_38 [1] : vector<8x384xf32> to vector<8xf32>
    %91 = vector.shape_cast %90 : vector<8xf32> to vector<8x1xf32>
    %cst_39 = arith.constant 3.840000e+02 : f32
    %92 = vector.broadcast %cst_39 : f32 to vector<8x1xf32>
    %93 = arith.divf %91, %92 : vector<8x1xf32>
    %94 = vector.broadcast %93 : vector<8x1xf32> to vector<8x384xf32>
    %95 = arith.subf %87, %94 : vector<8x384xf32>
    %96 = vector.broadcast %93 : vector<8x1xf32> to vector<8x384xf32>
    %97 = arith.subf %87, %96 : vector<8x384xf32>
    %98 = arith.mulf %95, %97 : vector<8x384xf32>
    %cst_40 = arith.constant dense<0.000000e+00> : vector<8xf32>
    %99 = vector.multi_reduction <add>, %98, %cst_40 [1] : vector<8x384xf32> to vector<8xf32>
    %100 = vector.shape_cast %99 : vector<8xf32> to vector<8x1xf32>
    %cst_41 = arith.constant 3.840000e+02 : f32
    %101 = vector.broadcast %cst_41 : f32 to vector<8x1xf32>
    %102 = arith.divf %100, %101 : vector<8x1xf32>
    %103 = vector.broadcast %93 : vector<8x1xf32> to vector<8x384xf32>
    %104 = arith.subf %87, %103 : vector<8x384xf32>
    %cst_42 = arith.constant 9.99999974E-6 : f32
    %105 = vector.broadcast %cst_42 : f32 to vector<8x1xf32>
    %106 = arith.addf %102, %105 : vector<8x1xf32>
    %107 = math.rsqrt %106 : vector<8x1xf32>
    %108 = vector.broadcast %107 : vector<8x1xf32> to vector<8x384xf32>
    %109 = arith.mulf %104, %108 : vector<8x384xf32>
    %110 = vector.broadcast %88 : vector<1x384xf32> to vector<8x384xf32>
    %111 = arith.mulf %109, %110 : vector<8x384xf32>
    %112 = vector.broadcast %89 : vector<1x384xf32> to vector<8x384xf32>
    %113 = arith.addf %111, %112 : vector<8x384xf32>
    %c0_43 = arith.constant 0 : index
    %c0_44 = arith.constant 0 : index
    %114 = vector.load %arg14[%c0_43, %c0_44] : memref<8x384xf32, #tpu.memory_space<vmem>>, vector<8x384xf32>
    tpu.vector_store %arg14[%c0_43, %c0_44], %113 {strides = array<i32>} : memref<8x384xf32, #tpu.memory_space<vmem>>, vector<8x384xf32>,
    return
  }
  func.func @transform_0(%arg0: i32) -> (i32, i32) {
    %c0_i32 = arith.constant 0 : i32
    %c0_i32_0 = arith.constant 0 : i32
    return %arg0, %c0_i32 : i32, i32
  }
  func.func @transform_1(%arg0: i32) -> (i32, i32) {
    %c0_i32 = arith.constant 0 : i32
    %c0_i32_0 = arith.constant 0 : i32
    %c0_i32_1 = arith.constant 0 : i32
    return %c0_i32, %c0_i32_0 : i32, i32
  }
  func.func @transform_2(%arg0: i32) -> (i32, i32) {
    %c0_i32 = arith.constant 0 : i32
    %c0_i32_0 = arith.constant 0 : i32
    %c0_i32_1 = arith.constant 0 : i32
    return %c0_i32, %c0_i32_0 : i32, i32
  }
  func.func @transform_3(%arg0: i32) -> (i32, i32) {
    %c0_i32 = arith.constant 0 : i32
    %c0_i32_0 = arith.constant 0 : i32
    %c0_i32_1 = arith.constant 0 : i32
    return %c0_i32, %c0_i32_0 : i32, i32
  }
  func.func @transform_4(%arg0: i32) -> (i32, i32) {
    %c0_i32 = arith.constant 0 : i32
    %c0_i32_0 = arith.constant 0 : i32
    %c0_i32_1 = arith.constant 0 : i32
    return %c0_i32, %c0_i32_0 : i32, i32
  }
  func.func @transform_5(%arg0: i32) -> (i32, i32) {
    %c0_i32 = arith.constant 0 : i32
    %c0_i32_0 = arith.constant 0 : i32
    %c0_i32_1 = arith.constant 0 : i32
    return %c0_i32, %c0_i32_0 : i32, i32
  }
  func.func @transform_6(%arg0: i32) -> (i32, i32) {
    %c0_i32 = arith.constant 0 : i32
    %c0_i32_0 = arith.constant 0 : i32
    %c0_i32_1 = arith.constant 0 : i32
    return %c0_i32, %c0_i32_0 : i32, i32
  }
  func.func @transform_7(%arg0: i32) -> (i32, i32) {
    %c0_i32 = arith.constant 0 : i32
    %c0_i32_0 = arith.constant 0 : i32
    %c0_i32_1 = arith.constant 0 : i32
    return %c0_i32, %c0_i32_0 : i32, i32
  }
  func.func @transform_8(%arg0: i32) -> (i32, i32) {
    %c0_i32 = arith.constant 0 : i32
    %c0_i32_0 = arith.constant 0 : i32
    %c0_i32_1 = arith.constant 0 : i32
    return %c0_i32, %c0_i32_0 : i32, i32
  }
  func.func @transform_9(%arg0: i32) -> (i32, i32) {
    %c0_i32 = arith.constant 0 : i32
    %c0_i32_0 = arith.constant 0 : i32
    %c0_i32_1 = arith.constant 0 : i32
    return %c0_i32, %c0_i32_0 : i32, i32
  }
  func.func @transform_10(%arg0: i32) -> (i32, i32) {
    %c0_i32 = arith.constant 0 : i32
    %c0_i32_0 = arith.constant 0 : i32
    %c0_i32_1 = arith.constant 0 : i32
    return %c0_i32, %c0_i32_0 : i32, i32
  }
  func.func @transform_11(%arg0: i32) -> (i32, i32) {
    %c0_i32 = arith.constant 0 : i32
    %c0_i32_0 = arith.constant 0 : i32
    %c0_i32_1 = arith.constant 0 : i32
    return %c0_i32, %c0_i32_0 : i32, i32
  }
  func.func @transform_12(%arg0: i32) -> (i32, i32) {
    %c0_i32 = arith.constant 0 : i32
    %c0_i32_0 = arith.constant 0 : i32
    %c0_i32_1 = arith.constant 0 : i32
    return %c0_i32, %c0_i32_0 : i32, i32
  }
  func.func @transform_13(%arg0: i32) -> (i32, i32) {
    %c0_i32 = arith.constant 0 : i32
    %c0_i32_0 = arith.constant 0 : i32
    return %arg0, %c0_i32 : i32, i32
  }
}

</mosaic_0001>

<llo_original>
// kernel: clinical_prior_encoder.1
$region0: #{clinical_prior_encoder.1}
  #allocation0 [shape = 'u32[]', space=smem, size = 0x4, offset = 0x4, fixed_abs, tag = 'smem constant byte address 0x4 - core index']
  #allocation1 [shape = 'u32[144,128]{1,0:T(1,128)}', space=vmem, size = 0x12000, scoped, tag = 'internal scratch']
  %s0 = inlined_call_operand.vmem [shape: f32[8,3], index: 0, kind: input, shape index: {}]
  %s1 = inlined_call_operand.vmem [shape: f32[3,128], index: 1, kind: input, shape index: {}]
  %s2 = inlined_call_operand.hbm [shape: f32[1,128], index: 2, kind: input, shape index: {}]
  %s3 = inlined_call_operand.vmem [shape: f32[1,128], index: 3, kind: input, shape index: {}]
  %s4 = inlined_call_operand.vmem [shape: f32[1,128], index: 4, kind: input, shape index: {}]
  %s5 = inlined_call_operand.hbm [shape: f32[128,256], index: 5, kind: input, shape index: {}]
  %s6 = inlined_call_operand.vmem [shape: f32[1,256], index: 6, kind: input, shape index: {}]
  %s7 = inlined_call_operand.vmem [shape: f32[1,256], index: 7, kind: input, shape index: {}]
  %s8 = inlined_call_operand.vmem [shape: f32[1,256], index: 8, kind: input, shape index: {}]
  %s9 = inlined_call_operand.hbm [shape: f32[256,384], index: 9, kind: input, shape index: {}]
  %s10 = inlined_call_operand.vmem [shape: f32[1,384], index: 10, kind: input, shape index: {}]
  %s11 = inlined_call_operand.vmem [shape: f32[1,384], index: 11, kind: input, shape index: {}]
  %s12 = inlined_call_operand.vmem [shape: f32[1,384], index: 12, kind: input, shape index: {}]
  %s13 = inlined_call_operand.hbm [shape: f32[8,384], index: 13, kind: output, shape index: {}]
  %s14 = sld [smem:[#allocation0]]
  $region74: #{clinical_prior_encoder.1} parent=0
    _
  %s16 = ssub.s32 1, %s14
  %s17 = scalar_select 0, %s16, %s14
  $region1: #{clinical_prior_encoder.1} parent=0
    #allocation2 [shape = 'u8[512]{0}', space=vmem, size = 0x400, scoped, tag = 'input window, operand 2, single buffered']
    #allocation3 [shape = 's32[1]{0}', space=sflag, size = 0x4, scoped, tag = 'scoped memory for clinical_prior_encoder.1']
    #allocation4 [shape = 's32[1]{0}', space=sflag, size = 0x4, scoped, tag = 'scoped memory for clinical_prior_encoder.1']
    #allocation5 [shape = 'u8[131072]{0}', space=vmem, size = 0x20000, scoped, tag = 'input window, operand 5, single buffered']
    #allocation6 [shape = 's32[1]{0}', space=sflag, size = 0x4, scoped, tag = 'scoped memory for clinical_prior_encoder.1']
    #allocation7 [shape = 'u8[393216]{0}', space=vmem, size = 0x60000, scoped, tag = 'input window, operand 9, single buffered']
    #allocation8 [shape = 'u8[12288]{0}', space=vmem, size = 0x3000, scoped, tag = 'output window, operand 0, single buffered']
    %18 = vsyncpa [#allocation3], 0
    %19 = vsyncpa [#allocation6], 0
    %20 = vsyncpa [#allocation4], 0
    // Predicated region
    $region2: #{clinical_prior_encoder.1} parent=1 // pred_check
      _
    $region3: #{clinical_prior_encoder.1} parent=1 // pred_check_branch
      %22 = sbr.rel (0) target = $region5
    $region4: #{clinical_prior_encoder.1} parent=1 // pred_region
      _
    $region5: #{clinical_prior_encoder.1} parent=1 // pred_fallthru
      _
    // Predicated region
    $region6: #{clinical_prior_encoder.1} parent=1 // pred_check
      _
    $region7: #{clinical_prior_encoder.1} parent=1 // pred_check_branch
      %24 = sbr.rel (0) target = $region9
    $region8: #{clinical_prior_encoder.1} parent=1 // pred_region
      _
    $region9: #{clinical_prior_encoder.1} parent=1 // pred_fallthru
      _
    // Predicated region
    $region10: #{clinical_prior_encoder.1} parent=1 // pred_check
      _
    $region11: #{clinical_prior_encoder.1} parent=1 // pred_check_branch
      %26 = sbr.rel (0) target = $region13
    $region12: #{clinical_prior_encoder.1} parent=1 // pred_region
      %s28 = ssub.s32 16, 16
      %29 = vsyncadd [#allocation3], %s28
      %s31 = sshll.u32 [#allocation2], 4
      %s32 = int_to_ptr.vmem [resolvable:$true] %s31
      %34 = dma.hbm_to_vmem [thread:$0]  %s2, 16, %s32, [#allocation3]
    $region13: #{clinical_prior_encoder.1} parent=1 // pred_fallthru
      _
    // Predicated region
    $region14: #{clinical_prior_encoder.1} parent=1 // pred_check
      _
    $region15: #{clinical_prior_encoder.1} parent=1 // pred_check_branch
      %36 = sbr.rel (0) target = $region17
    $region16: #{clinical_prior_encoder.1} parent=1 // pred_region
      _
    $region17: #{clinical_prior_encoder.1} parent=1 // pred_fallthru
      _
    // Predicated region
    $region18: #{clinical_prior_encoder.1} parent=1 // pred_check
      _
    $region19: #{clinical_prior_encoder.1} parent=1 // pred_check_branch
      %38 = sbr.rel (0) target = $region21
    $region20: #{clinical_prior_encoder.1} parent=1 // pred_region
      _
    $region21: #{clinical_prior_encoder.1} parent=1 // pred_fallthru
      _
    // Predicated region
    $region22: #{clinical_prior_encoder.1} parent=1 // pred_check
      _
    $region23: #{clinical_prior_encoder.1} parent=1 // pred_check_branch
      %40 = sbr.rel (0) target = $region25
    $region24: #{clinical_prior_encoder.1} parent=1 // pred_region
      %s42 = ssub.s32 4096, 4096
      %43 = vsyncadd [#allocation6], %s42
      %s44 = sshll.u32 [#allocation5], 4
      %s45 = int_to_ptr.vmem [resolvable:$true] %s44
      %50 = dma.hbm_to_vmem [thread:$0]  %s5, 4096, %s45, [#allocation6], 256, 256, 16
    $region25: #{clinical_prior_encoder.1} parent=1 // pred_fallthru
      _
    // Predicated region
    $region26: #{clinical_prior_encoder.1} parent=1 // pred_check
      _
    $region27: #{clinical_prior_encoder.1} parent=1 // pred_check_branch
      %52 = sbr.rel (0) target = $region29
    $region28: #{clinical_prior_encoder.1} parent=1 // pred_region
      _
    $region29: #{clinical_prior_encoder.1} parent=1 // pred_fallthru
      _
    // Predicated region
    $region30: #{clinical_prior_encoder.1} parent=1 // pred_check
      _
    $region31: #{clinical_prior_encoder.1} parent=1 // pred_check_branch
      %54 = sbr.rel (0) target = $region33
    $region32: #{clinical_prior_encoder.1} parent=1 // pred_region
      _
    $region33: #{clinical_prior_encoder.1} parent=1 // pred_fallthru
      _
    // Predicated region
    $region34: #{clinical_prior_encoder.1} parent=1 // pred_check
      _
    $region35: #{clinical_prior_encoder.1} parent=1 // pred_check_branch
      %56 = sbr.rel (0) target = $region37
    $region36: #{clinical_prior_encoder.1} parent=1 // pred_region
      _
    $region37: #{clinical_prior_encoder.1} parent=1 // pred_fallthru
      _
    // Predicated region
    $region38: #{clinical_prior_encoder.1} parent=1 // pred_check
      _
    $region39: #{clinical_prior_encoder.1} parent=1 // pred_check_branch
      %58 = sbr.rel (0) target = $region41
    $region40: #{clinical_prior_encoder.1} parent=1 // pred_region
      %s60 = ssub.s32 12288, 12288
      %61 = vsyncadd [#allocation6], %s60
      %s62 = sshll.u32 [#allocation7], 4
      %s63 = int_to_ptr.vmem [resolvable:$true] %s62
      %68 = dma.hbm_to_vmem [thread:$0]  %s9, 12288, %s63, [#allocation6], 384, 384, 24
    $region41: #{clinical_prior_encoder.1} parent=1 // pred_fallthru
      _
    // Predicated region
    $region42: #{clinical_prior_encoder.1} parent=1 // pred_check
      _
    $region43: #{clinical_prior_encoder.1} parent=1 // pred_check_branch
      %70 = sbr.rel (0) target = $region45
    $region44: #{clinical_prior_encoder.1} parent=1 // pred_region
      _
    $region45: #{clinical_prior_encoder.1} parent=1 // pred_fallthru
      _
    // Predicated region
    $region46: #{clinical_prior_encoder.1} parent=1 // pred_check
      _
    $region47: #{clinical_prior_encoder.1} parent=1 // pred_check_branch
      %72 = sbr.rel (0) target = $region49
    $region48: #{clinical_prior_encoder.1} parent=1 // pred_region
      _
    $region49: #{clinical_prior_encoder.1} parent=1 // pred_fallthru
      _
    // Predicated region
    $region50: #{clinical_prior_encoder.1} parent=1 // pred_check
      _
    $region51: #{clinical_prior_encoder.1} parent=1 // pred_check_branch
      %74 = sbr.rel (0) target = $region53
    $region52: #{clinical_prior_encoder.1} parent=1 // pred_region
      _
    $region53: #{clinical_prior_encoder.1} parent=1 // pred_fallthru
      _
    // Predicated region
    $region54: #{clinical_prior_encoder.1} parent=1 // pred_check
      _
    $region55: #{clinical_prior_encoder.1} parent=1 // pred_check_branch
      %76 = sbr.rel (0) target = $region57
    $region56: #{clinical_prior_encoder.1} parent=1 // pred_region
      %77 = dma.done [#allocation3], 16
    $region57: #{clinical_prior_encoder.1} parent=1 // pred_fallthru
      _
    // Predicated region
    $region58: #{clinical_prior_encoder.1} parent=1 // pred_check
      _
    $region59: #{clinical_prior_encoder.1} parent=1 // pred_check_branch
      %79 = sbr.rel (0) target = $region61
    $region60: #{clinical_prior_encoder.1} parent=1 // pred_region
      %80 = dma.done [#allocation6], 4096
    $region61: #{clinical_prior_encoder.1} parent=1 // pred_fallthru
      _
    // Predicated region
    $region62: #{clinical_prior_encoder.1} parent=1 // pred_check
      _
    $region63: #{clinical_prior_encoder.1} parent=1 // pred_check_branch
      %82 = sbr.rel (0) target = $region65
    $region64: #{clinical_prior_encoder.1} parent=1 // pred_region
      %83 = dma.done [#allocation6], 12288
    $region65: #{clinical_prior_encoder.1} parent=1 // pred_fallthru
      _
    %v84 = vld [vmem:[%s0] sm:$0xff]
    %v85 = vld [vmem:[%s1] sm:$0x7]
    %87 = vset.pattern.permute.xlu0 0
    %88 = vperm.xlu0 %87, %v84
    %v89 = vpop.permute.xlu0 %88
    %v91 = vlaneseq
    %v92 = vshrl.u32 %v91, 7
    %v93 = vsub.s32 0, %v92
    %v94 = vrot.slane %v85, %v93
    %v95 = vmul.f32 %v89, %v94
    %96 = vset.pattern.permute.xlu0 1
    %97 = vperm.xlu0 %96, %v84
    %v98 = vpop.permute.xlu0 %97
    %v100 = vlaneseq
    %v101 = vshrl.u32 %v100, 7
    %v102 = vsub.s32 1, %v101
    %v103 = vrot.slane %v85, %v102
    %v104 = vmul.f32 %v98, %v103
    %v105 = vadd.f32 %v95, %v104
    %106 = vset.pattern.permute.xlu0 2
    %107 = vperm.xlu0 %106, %v84
    %v108 = vpop.permute.xlu0 %107
    %v110 = vlaneseq
    %v111 = vshrl.u32 %v110, 7
    %v112 = vsub.s32 2, %v111
    %v113 = vrot.slane %v85, %v112
    %v114 = vmul.f32 %v108, %v113
    %v115 = vadd.f32 %v105, %v114
    %v116 = vld [vmem:[#allocation2] sm:$0x1]
    %v118 = vlaneseq
    %v119 = vshrl.u32 %v118, 7
    %v120 = vsub.s32 0, %v119
    %v121 = vrot.slane %v116, %v120
    %v123 = vadd.f32 %v115, %v121
    %v124 = vld [vmem:[%s3] sm:$0x1]
    %v125 = vld [vmem:[%s4] sm:$0x1]
    %126 = vadd.xlane.f32.xlu0 %v123
    %v127 = vpop.xlane.xlu0 %126
    %v128 = vrcp.pop 128.0
    %v129 = vmul.f32 %v127, %v128
    %v130 = vsub.f32 %v123, %v129
    %v131 = vmul.f32 %v130, %v130
    %132 = vadd.xlane.f32.xlu0 %v131
    %v133 = vpop.xlane.xlu0 %132
    %v134 = vmul.f32 %v133, %v128
    %v135 = vadd.f32 %v134, 1e-05
    %v136 = vrsqrt.pop %v135
    %v137 = vmul.f32 %v130, %v136
    %v139 = vlaneseq
    %v140 = vshrl.u32 %v139, 7
    %v141 = vsub.s32 0, %v140
    %v142 = vrot.slane %v124, %v141
    %v144 = vmul.f32 %v137, %v142
    %v146 = vlaneseq
    %v147 = vshrl.u32 %v146, 7
    %v148 = vsub.s32 0, %v147
    %v149 = vrot.slane %v125, %v148
    %v151 = vadd.f32 %v144, %v149
    %v152 = vmax.f32 %v151, 0.0
    %v153 = vld [vmem:[#allocation5] sm:$0xff]
    %v154 = vld [vmem:[#allocation5 + $0x8] sm:$0xff]
    %v155 = vld [vmem:[#allocation5 + $0x10] sm:$0xff]
    %v156 = vld [vmem:[#allocation5 + $0x18] sm:$0xff]
    %v157 = vld [vmem:[#allocation5 + $0x20] sm:$0xff]
    %v158 = vld [vmem:[#allocation5 + $0x28] sm:$0xff]
    %v159 = vld [vmem:[#allocation5 + $0x30] sm:$0xff]
    %v160 = vld [vmem:[#allocation5 + $0x38] sm:$0xff]
    %v161 = vld [vmem:[#allocation5 + $0x40] sm:$0xff]
    %v162 = vld [vmem:[#allocation5 + $0x48] sm:$0xff]
    %v163 = vld [vmem:[#allocation5 + $0x50] sm:$0xff]
    %v164 = vld [vmem:[#allocation5 + $0x58] sm:$0xff]
    %v165 = vld [vmem:[#allocation5 + $0x60] sm:$0xff]
    %v166 = vld [vmem:[#allocation5 + $0x68] sm:$0xff]
    %v167 = vld [vmem:[#allocation5 + $0x70] sm:$0xff]
    %v168 = vld [vmem:[#allocation5 + $0x78] sm:$0xff]
    %v169 = vld [vmem:[#allocation5 + $0x80] sm:$0xff]
    %v170 = vld [vmem:[#allocation5 + $0x88] sm:$0xff]
    %v171 = vld [vmem:[#allocation5 + $0x90] sm:$0xff]
    %v172 = vld [vmem:[#allocation5 + $0x98] sm:$0xff]
    %v173 = vld [vmem:[#allocation5 + $0xa0] sm:$0xff]
    %v174 = vld [vmem:[#allocation5 + $0xa8] sm:$0xff]
    %v175 = vld [vmem:[#allocation5 + $0xb0] sm:$0xff]
    %v176 = vld [vmem:[#allocation5 + $0xb8] sm:$0xff]
    %v177 = vld [vmem:[#allocation5 + $0xc0] sm:$0xff]
    %v178 = vld [vmem:[#allocation5 + $0xc8] sm:$0xff]
    %v179 = vld [vmem:[#allocation5 + $0xd0] sm:$0xff]
    %v180 = vld [vmem:[#allocation5 + $0xd8] sm:$0xff]
    %v181 = vld [vmem:[#allocation5 + $0xe0] sm:$0xff]
    %v182 = vld [vmem:[#allocation5 + $0xe8] sm:$0xff]
    %v183 = vld [vmem:[#allocation5 + $0xf0] sm:$0xff]
    %v184 = vld [vmem:[#allocation5 + $0xf8] sm:$0xff]
    %v185 = vld [vmem:[%s6] sm:$0x3]
    %v187 = vlaneseq
    %v188 = vshrl.u32 %v187, 7
    %v189 = vsub.s32 0, %v188
    %v190 = vrot.slane %v185, %v189
    %v191 = vlaneseq
    %v192 = vshrl.u32 %v191, 7
    %v193 = vsub.s32 1, %v192
    %v194 = vrot.slane %v185, %v193
    %197 = vmatprep.subr.mxu0 %v154
    %198 = vmatpush1.msra.mxu0 %v153
    %199 = vmatprep.subr.mxu0 %v156
    %200 = vmatpush1.msra.mxu0 %v155
    %201 = vmatprep.subr.mxu0 %v158
    %202 = vmatpush1.msra.mxu0 %v157
    %203 = vmatprep.subr.mxu0 %v160
    %204 = vmatpush1.msra.mxu0 %v159
    %205 = vmatprep.subr.mxu0 %v162
    %206 = vmatpush1.msra.mxu0 %v161
    %207 = vmatprep.subr.mxu0 %v164
    %208 = vmatpush1.msra.mxu0 %v163
    %209 = vmatprep.subr.mxu0 %v166
    %210 = vmatpush1.msra.mxu0 %v165
    %211 = vmatprep.subr.mxu0 %v168
    %212 = vmatpush1.msra.mxu0 %v167
    %213 = vmatprep.subr.mxu0 %v170
    %214 = vmatpush1.msra.mxu0 %v169
    %215 = vmatprep.subr.mxu0 %v172
    %216 = vmatpush1.msra.mxu0 %v171
    %217 = vmatprep.subr.mxu0 %v174
    %218 = vmatpush1.msra.mxu0 %v173
    %219 = vmatprep.subr.mxu0 %v176
    %220 = vmatpush1.msra.mxu0 %v175
    %221 = vmatprep.subr.mxu0 %v178
    %222 = vmatpush1.msra.mxu0 %v177
    %223 = vmatprep.subr.mxu0 %v180
    %224 = vmatpush1.msra.mxu0 %v179
    %225 = vmatprep.subr.mxu0 %v182
    %226 = vmatpush1.msra.mxu0 %v181
    %227 = vmatprep.subr.mxu0 %v184
    %228 = vmatpush1.msra.mxu0 %v183
    %229 = vmatprep.subr.mxu0 0.0
    %230 = vmatpush1.msra.mxu0 0.0
    %231 = vmatprep.subr.mxu0 0.0
    %232 = vmatpush1.msra.mxu0 0.0
    %233 = vmatprep.subr.mxu0 0.0
    %234 = vmatpush1.msra.mxu0 0.0
    %235 = vmatprep.subr.mxu0 0.0
    %236 = vmatpush1.msra.mxu0 0.0
    %237 = vmatprep.subr.mxu0 0.0
    %238 = vmatpush1.msra.mxu0 0.0
    %239 = vmatprep.subr.mxu0 0.0
    %240 = vmatpush1.msra.mxu0 0.0
    %241 = vmatprep.subr.mxu0 0.0
    %242 = vmatpush1.msra.mxu0 0.0
    %243 = vmatprep.subr.mxu0 0.0
    %244 = vmatpush1.msra.mxu0 0.0
    %245 = vmatprep.subr.mxu0 0.0
    %246 = vmatpush1.msra.mxu0 0.0
    %247 = vmatprep.subr.mxu0 0.0
    %248 = vmatpush1.msra.mxu0 0.0
    %249 = vmatprep.subr.mxu0 0.0
    %250 = vmatpush1.msra.mxu0 0.0
    %251 = vmatprep.subr.mxu0 0.0
    %252 = vmatpush1.msra.mxu0 0.0
    %253 = vmatprep.subr.mxu0 0.0
    %254 = vmatpush1.msra.mxu0 0.0
    %255 = vmatprep.subr.mxu0 0.0
    %256 = vmatpush1.msra.mxu0 0.0
    %257 = vmatprep.subr.mxu0 0.0
    %258 = vmatpush1.msra.mxu0 0.0
    %259 = vmatprep.subr.mxu0 0.0
    %260 = vmatpush1.msra.mxu0 0.0
    %261 = vmatprep.mubr.f32.mxu0 0.0
    %262 = vmatmul.mubr.f32.gmra.mrb[0].mxu0 %v152
    %v263 = vpop.f32.mrb[0].mxu0
    %v264 = vadd.f32 %v190, %v263
    %v265 = vpop.f32.mrb[0].mxu0
    %v266 = vadd.f32 %v194, %v265
    %267 = vdwg.mxu0
    %v268 = vld [vmem:[%s7] sm:$0x3]
    %v269 = vld [vmem:[%s8] sm:$0x3]
    %v270 = vadd.f32 %v264, %v266
    %271 = vadd.xlane.f32.xlu0 %v270
    %v272 = vpop.xlane.xlu0 %271
    %v273 = vrcp.pop 256.0
    %v274 = vmul.f32 %v272, %v273
    %v275 = vsub.f32 %v264, %v274
    %v276 = vsub.f32 %v266, %v274
    %v277 = vmul.f32 %v275, %v275
    %v278 = vmul.f32 %v276, %v276
    %v279 = vadd.f32 %v277, %v278
    %280 = vadd.xlane.f32.xlu0 %v279
    %v281 = vpop.xlane.xlu0 %280
    %v282 = vmul.f32 %v281, %v273
    %v283 = vadd.f32 %v282, 1e-05
    %v284 = vrsqrt.pop %v283
    %v285 = vmul.f32 %v275, %v284
    %v286 = vmul.f32 %v276, %v284
    %v288 = vlaneseq
    %v289 = vshrl.u32 %v288, 7
    %v290 = vsub.s32 0, %v289
    %v291 = vrot.slane %v268, %v290
    %v292 = vlaneseq
    %v293 = vshrl.u32 %v292, 7
    %v294 = vsub.s32 1, %v293
    %v295 = vrot.slane %v268, %v294
    %v298 = vmul.f32 %v285, %v291
    %v299 = vmul.f32 %v286, %v295
    %v301 = vlaneseq
    %v302 = vshrl.u32 %v301, 7
    %v303 = vsub.s32 0, %v302
    %v304 = vrot.slane %v269, %v303
    %v305 = vlaneseq
    %v306 = vshrl.u32 %v305, 7
    %v307 = vsub.s32 1, %v306
    %v308 = vrot.slane %v269, %v307
    %v311 = vadd.f32 %v298, %v304
    %v312 = vadd.f32 %v299, %v308
    %v313 = vmax.f32 %v311, 0.0
    %v314 = vmax.f32 %v312, 0.0
    %v315 = vld [vmem:[#allocation7] sm:$0xff]
    %v316 = vld [vmem:[#allocation7 + $0x8] sm:$0xff]
    %v317 = vld [vmem:[#allocation7 + $0x10] sm:$0xff]
    %v318 = vld [vmem:[#allocation7 + $0x18] sm:$0xff]
    %v319 = vld [vmem:[#allocation7 + $0x20] sm:$0xff]
    %v320 = vld [vmem:[#allocation7 + $0x28] sm:$0xff]
    %v321 = vld [vmem:[#allocation7 + $0x30] sm:$0xff]
    %v322 = vld [vmem:[#allocation7 + $0x38] sm:$0xff]
    %v323 = vld [vmem:[#allocation7 + $0x40] sm:$0xff]
    %v324 = vld [vmem:[#allocation7 + $0x48] sm:$0xff]
    %v325 = vld [vmem:[#allocation7 + $0x50] sm:$0xff]
    %v326 = vld [vmem:[#allocation7 + $0x58] sm:$0xff]
    %v327 = vld [vmem:[#allocation7 + $0x60] sm:$0xff]
    %v328 = vld [vmem:[#allocation7 + $0x68] sm:$0xff]
    %v329 = vld [vmem:[#allocation7 + $0x70] sm:$0xff]
    %v330 = vld [vmem:[#allocation7 + $0x78] sm:$0xff]
    %v331 = vld [vmem:[#allocation7 + $0x80] sm:$0xff]
    %v332 = vld [vmem:[#allocation7 + $0x88] sm:$0xff]
    %v333 = vld [vmem:[#allocation7 + $0x90] sm:$0xff]
    %v334 = vld [vmem:[#allocation7 + $0x98] sm:$0xff]
    %v335 = vld [vmem:[#allocation7 + $0xa0] sm:$0xff]
    %v336 = vld [vmem:[#allocation7 + $0xa8] sm:$0xff]
    %v337 = vld [vmem:[#allocation7 + $0xb0] sm:$0xff]
    %v338 = vld [vmem:[#allocation7 + $0xb8] sm:$0xff]
    %v339 = vld [vmem:[#allocation7 + $0xc0] sm:$0xff]
    %v340 = vld [vmem:[#allocation7 + $0xc8] sm:$0xff]
    %v341 = vld [vmem:[#allocation7 + $0xd0] sm:$0xff]
    %v342 = vld [vmem:[#allocation7 + $0xd8] sm:$0xff]
    %v343 = vld [vmem:[#allocation7 + $0xe0] sm:$0xff]
    %v344 = vld [vmem:[#allocation7 + $0xe8] sm:$0xff]
    %v345 = vld [vmem:[#allocation7 + $0xf0] sm:$0xff]
    %v346 = vld [vmem:[#allocation7 + $0xf8] sm:$0xff]
    %v347 = vld [vmem:[#allocation7 + $0x100] sm:$0xff]
    %v348 = vld [vmem:[#allocation7 + $0x108] sm:$0xff]
    %v349 = vld [vmem:[#allocation7 + $0x110] sm:$0xff]
    %v350 = vld [vmem:[#allocation7 + $0x118] sm:$0xff]
    %v351 = vld [vmem:[#allocation7 + $0x120] sm:$0xff]
    %v352 = vld [vmem:[#allocation7 + $0x128] sm:$0xff]
    %v353 = vld [vmem:[#allocation7 + $0x130] sm:$0xff]
    %v354 = vld [vmem:[#allocation7 + $0x138] sm:$0xff]
    %v355 = vld [vmem:[#allocation7 + $0x140] sm:$0xff]
    %v356 = vld [vmem:[#allocation7 + $0x148] sm:$0xff]
    %v357 = vld [vmem:[#allocation7 + $0x150] sm:$0xff]
    %v358 = vld [vmem:[#allocation7 + $0x158] sm:$0xff]
    %v359 = vld [vmem:[#allocation7 + $0x160] sm:$0xff]
    %v360 = vld [vmem:[#allocation7 + $0x168] sm:$0xff]
    %v361 = vld [vmem:[#allocation7 + $0x170] sm:$0xff]
    %v362 = vld [vmem:[#allocation7 + $0x178] sm:$0xff]
    %v363 = vld [vmem:[#allocation7 + $0x180] sm:$0xff]
    %v364 = vld [vmem:[#allocation7 + $0x188] sm:$0xff]
    %v365 = vld [vmem:[#allocation7 + $0x190] sm:$0xff]
    %v366 = vld [vmem:[#allocation7 + $0x198] sm:$0xff]
    %v367 = vld [vmem:[#allocation7 + $0x1a0] sm:$0xff]
    %v368 = vld [vmem:[#allocation7 + $0x1a8] sm:$0xff]
    %v369 = vld [vmem:[#allocation7 + $0x1b0] sm:$0xff]
    %v370 = vld [vmem:[#allocation7 + $0x1b8] sm:$0xff]
    %v371 = vld [vmem:[#allocation7 + $0x1c0] sm:$0xff]
    %v372 = vld [vmem:[#allocation7 + $0x1c8] sm:$0xff]
    %v373 = vld [vmem:[#allocation7 + $0x1d0] sm:$0xff]
    %v374 = vld [vmem:[#allocation7 + $0x1d8] sm:$0xff]
    %v375 = vld [vmem:[#allocation7 + $0x1e0] sm:$0xff]
    %v376 = vld [vmem:[#allocation7 + $0x1e8] sm:$0xff]
    %v377 = vld [vmem:[#allocation7 + $0x1f0] sm:$0xff]
    %v378 = vld [vmem:[#allocation7 + $0x1f8] sm:$0xff]
    %v379 = vld [vmem:[#allocation7 + $0x200] sm:$0xff]
    %v380 = vld [vmem:[#allocation7 + $0x208] sm:$0xff]
    %v381 = vld [vmem:[#allocation7 + $0x210] sm:$0xff]
    %v382 = vld [vmem:[#allocation7 + $0x218] sm:$0xff]
    %v383 = vld [vmem:[#allocation7 + $0x220] sm:$0xff]
    %v384 = vld [vmem:[#allocation7 + $0x228] sm:$0xff]
    %v385 = vld [vmem:[#allocation7 + $0x230] sm:$0xff]
    %v386 = vld [vmem:[#allocation7 + $0x238] sm:$0xff]
    %v387 = vld [vmem:[#allocation7 + $0x240] sm:$0xff]
    %v388 = vld [vmem:[#allocation7 + $0x248] sm:$0xff]
    %v389 = vld [vmem:[#allocation7 + $0x250] sm:$0xff]
    %v390 = vld [vmem:[#allocation7 + $0x258] sm:$0xff]
    %v391 = vld [vmem:[#allocation7 + $0x260] sm:$0xff]
    %v392 = vld [vmem:[#allocation7 + $0x268] sm:$0xff]
    %v393 = vld [vmem:[#allocation7 + $0x270] sm:$0xff]
    %v394 = vld [vmem:[#allocation7 + $0x278] sm:$0xff]
    %v395 = vld [vmem:[#allocation7 + $0x280] sm:$0xff]
    %v396 = vld [vmem:[#allocation7 + $0x288] sm:$0xff]
    %v397 = vld [vmem:[#allocation7 + $0x290] sm:$0xff]
    %v398 = vld [vmem:[#allocation7 + $0x298] sm:$0xff]
    %v399 = vld [vmem:[#allocation7 + $0x2a0] sm:$0xff]
    %v400 = vld [vmem:[#allocation7 + $0x2a8] sm:$0xff]
    %v401 = vld [vmem:[#allocation7 + $0x2b0] sm:$0xff]
    %v402 = vld [vmem:[#allocation7 + $0x2b8] sm:$0xff]
    %v403 = vld [vmem:[#allocation7 + $0x2c0] sm:$0xff]
    %v404 = vld [vmem:[#allocation7 + $0x2c8] sm:$0xff]
    %v405 = vld [vmem:[#allocation7 + $0x2d0] sm:$0xff]
    %v406 = vld [vmem:[#allocation7 + $0x2d8] sm:$0xff]
    %v407 = vld [vmem:[#allocation7 + $0x2e0] sm:$0xff]
    %v408 = vld [vmem:[#allocation7 + $0x2e8] sm:$0xff]
    %v409 = vld [vmem:[#allocation7 + $0x2f0] sm:$0xff]
    %v410 = vld [vmem:[#allocation7 + $0x2f8] sm:$0xff]
    %v411 = vld [vmem:[%s10] sm:$0x7]
    %v413 = vlaneseq
    %v414 = vshrl.u32 %v413, 7
    %v415 = vsub.s32 0, %v414
    %v416 = vrot.slane %v411, %v415
    %v417 = vlaneseq
    %v418 = vshrl.u32 %v417, 7
    %v419 = vsub.s32 1, %v418
    %v420 = vrot.slane %v411, %v419
    %v421 = vlaneseq
    %v422 = vshrl.u32 %v421, 7
    %v423 = vsub.s32 2, %v422
    %v424 = vrot.slane %v411, %v423
    %428 = vmatprep.subr.mxu0 %v316
    %429 = vmatpush1.msra.mxu0 %v315
    %430 = vmatprep.subr.mxu0 %v319
    %431 = vmatpush1.msra.mxu0 %v318
    %432 = vmatprep.subr.mxu0 %v322
    %433 = vmatpush1.msra.mxu0 %v321
    %434 = vmatprep.subr.mxu0 %v325
    %435 = vmatpush1.msra.mxu0 %v324
    %436 = vmatprep.subr.mxu0 %v328
    %437 = vmatpush1.msra.mxu0 %v327
    %438 = vmatprep.subr.mxu0 %v331
    %439 = vmatpush1.msra.mxu0 %v330
    %440 = vmatprep.subr.mxu0 %v334
    %441 = vmatpush1.msra.mxu0 %v333
    %442 = vmatprep.subr.mxu0 %v337
    %443 = vmatpush1.msra.mxu0 %v336
    %444 = vmatprep.subr.mxu0 %v340
    %445 = vmatpush1.msra.mxu0 %v339
    %446 = vmatprep.subr.mxu0 %v343
    %447 = vmatpush1.msra.mxu0 %v342
    %448 = vmatprep.subr.mxu0 %v346
    %449 = vmatpush1.msra.mxu0 %v345
    %450 = vmatprep.subr.mxu0 %v349
    %451 = vmatpush1.msra.mxu0 %v348
    %452 = vmatprep.subr.mxu0 %v352
    %453 = vmatpush1.msra.mxu0 %v351
    %454 = vmatprep.subr.mxu0 %v355
    %455 = vmatpush1.msra.mxu0 %v354
    %456 = vmatprep.subr.mxu0 %v358
    %457 = vmatpush1.msra.mxu0 %v357
    %458 = vmatprep.subr.mxu0 %v361
    %459 = vmatpush1.msra.mxu0 %v360
    %460 = vmatprep.subr.mxu0 %v364
    %461 = vmatpush1.msra.mxu0 %v363
    %462 = vmatprep.subr.mxu0 %v367
    %463 = vmatpush1.msra.mxu0 %v366
    %464 = vmatprep.subr.mxu0 %v370
    %465 = vmatpush1.msra.mxu0 %v369
    %466 = vmatprep.subr.mxu0 %v373
    %467 = vmatpush1.msra.mxu0 %v372
    %468 = vmatprep.subr.mxu0 %v376
    %469 = vmatpush1.msra.mxu0 %v375
    %470 = vmatprep.subr.mxu0 %v379
    %471 = vmatpush1.msra.mxu0 %v378
    %472 = vmatprep.subr.mxu0 %v382
    %473 = vmatpush1.msra.mxu0 %v381
    %474 = vmatprep.subr.mxu0 %v385
    %475 = vmatpush1.msra.mxu0 %v384
    %476 = vmatprep.subr.mxu0 %v388
    %477 = vmatpush1.msra.mxu0 %v387
    %478 = vmatprep.subr.mxu0 %v391
    %479 = vmatpush1.msra.mxu0 %v390
    %480 = vmatprep.subr.mxu0 %v394
    %481 = vmatpush1.msra.mxu0 %v393
    %482 = vmatprep.subr.mxu0 %v397
    %483 = vmatpush1.msra.mxu0 %v396
    %484 = vmatprep.subr.mxu0 %v400
    %485 = vmatpush1.msra.mxu0 %v399
    %486 = vmatprep.subr.mxu0 %v403
    %487 = vmatpush1.msra.mxu0 %v402
    %488 = vmatprep.subr.mxu0 %v406
    %489 = vmatpush1.msra.mxu0 %v405
    %490 = vmatprep.subr.mxu0 %v409
    %491 = vmatpush1.msra.mxu0 %v408
    %492 = vmatprep.mubr.f32.mxu0 %v314
    %493 = vmatmul.mubr.f32.gmra.mrb[0].mxu0 %v313
    %v494 = vpop.f32.mrb[0].mxu0
    %v495 = vadd.f32 %v416, %v494
    %v496 = vpop.f32.mrb[0].mxu0
    %v497 = vadd.f32 %v420, %v496
    %498 = vdwg.mxu0
    %499 = vmatprep.subr.mxu0 0.0
    %500 = vmatpush1.msra.mxu0 %v317
    %501 = vmatprep.subr.mxu0 0.0
    %502 = vmatpush1.msra.mxu0 %v320
    %503 = vmatprep.subr.mxu0 0.0
    %504 = vmatpush1.msra.mxu0 %v323
    %505 = vmatprep.subr.mxu0 0.0
    %506 = vmatpush1.msra.mxu0 %v326
    %507 = vmatprep.subr.mxu0 0.0
    %508 = vmatpush1.msra.mxu0 %v329
    %509 = vmatprep.subr.mxu0 0.0
    %510 = vmatpush1.msra.mxu0 %v332
    %511 = vmatprep.subr.mxu0 0.0
    %512 = vmatpush1.msra.mxu0 %v335
    %513 = vmatprep.subr.mxu0 0.0
    %514 = vmatpush1.msra.mxu0 %v338
    %515 = vmatprep.subr.mxu0 0.0
    %516 = vmatpush1.msra.mxu0 %v341
    %517 = vmatprep.subr.mxu0 0.0
    %518 = vmatpush1.msra.mxu0 %v344
    %519 = vmatprep.subr.mxu0 0.0
    %520 = vmatpush1.msra.mxu0 %v347
    %521 = vmatprep.subr.mxu0 0.0
    %522 = vmatpush1.msra.mxu0 %v350
    %523 = vmatprep.subr.mxu0 0.0
    %524 = vmatpush1.msra.mxu0 %v353
    %525 = vmatprep.subr.mxu0 0.0
    %526 = vmatpush1.msra.mxu0 %v356
    %527 = vmatprep.subr.mxu0 0.0
    %528 = vmatpush1.msra.mxu0 %v359
    %529 = vmatprep.subr.mxu0 0.0
    %530 = vmatpush1.msra.mxu0 %v362
    %531 = vmatprep.subr.mxu0 0.0
    %532 = vmatpush1.msra.mxu0 %v365
    %533 = vmatprep.subr.mxu0 0.0
    %534 = vmatpush1.msra.mxu0 %v368
    %535 = vmatprep.subr.mxu0 0.0
    %536 = vmatpush1.msra.mxu0 %v371
    %537 = vmatprep.subr.mxu0 0.0
    %538 = vmatpush1.msra.mxu0 %v374
    %539 = vmatprep.subr.mxu0 0.0
    %540 = vmatpush1.msra.mxu0 %v377
    %541 = vmatprep.subr.mxu0 0.0
    %542 = vmatpush1.msra.mxu0 %v380
    %543 = vmatprep.subr.mxu0 0.0
    %544 = vmatpush1.msra.mxu0 %v383
    %545 = vmatprep.subr.mxu0 0.0
    %546 = vmatpush1.msra.mxu0 %v386
    %547 = vmatprep.subr.mxu0 0.0
    %548 = vmatpush1.msra.mxu0 %v389
    %549 = vmatprep.subr.mxu0 0.0
    %550 = vmatpush1.msra.mxu0 %v392
    %551 = vmatprep.subr.mxu0 0.0
    %552 = vmatpush1.msra.mxu0 %v395
    %553 = vmatprep.subr.mxu0 0.0
    %554 = vmatpush1.msra.mxu0 %v398
    %555 = vmatprep.subr.mxu0 0.0
    %556 = vmatpush1.msra.mxu0 %v401
    %557 = vmatprep.subr.mxu0 0.0
    %558 = vmatpush1.msra.mxu0 %v404
    %559 = vmatprep.subr.mxu0 0.0
    %560 = vmatpush1.msra.mxu0 %v407
    %561 = vmatprep.subr.mxu0 0.0
    %562 = vmatpush1.msra.mxu0 %v410
    %563 = vmatprep.mubr.f32.mxu0 %v314
    %564 = vmatmul.mubr.f32.gmra.mrb[0].mxu0 %v313
    %v565 = vpop.f32.mrb[0].mxu0
    %v566 = vadd.f32 %v424, %v565
    %v567 = vpop.f32.mrb[0].mxu0
    %568 = vdwg.mxu0
    %v569 = vld [vmem:[%s11] sm:$0x7]
    %v570 = vld [vmem:[%s12] sm:$0x7]
    %v571 = vadd.f32 %v495, %v497
    %v572 = vadd.f32 %v571, %v566
    %573 = vadd.xlane.f32.xlu0 %v572
    %v574 = vpop.xlane.xlu0 %573
    %v575 = vrcp.pop 384.0
    %v576 = vmul.f32 %v574, %v575
    %v577 = vsub.f32 %v495, %v576
    %v578 = vsub.f32 %v497, %v576
    %v579 = vsub.f32 %v566, %v576
    %v580 = vmul.f32 %v577, %v577
    %v581 = vmul.f32 %v578, %v578
    %v582 = vmul.f32 %v579, %v579
    %v583 = vadd.f32 %v580, %v581
    %v584 = vadd.f32 %v583, %v582
    %585 = vadd.xlane.f32.xlu0 %v584
    %v586 = vpop.xlane.xlu0 %585
    %v587 = vmul.f32 %v586, %v575
    %v588 = vadd.f32 %v587, 1e-05
    %v589 = vrsqrt.pop %v588
    %v590 = vmul.f32 %v577, %v589
    %v591 = vmul.f32 %v578, %v589
    %v592 = vmul.f32 %v579, %v589
    %v594 = vlaneseq
    %v595 = vshrl.u32 %v594, 7
    %v596 = vsub.s32 0, %v595
    %v597 = vrot.slane %v569, %v596
    %v598 = vlaneseq
    %v599 = vshrl.u32 %v598, 7
    %v600 = vsub.s32 1, %v599
    %v601 = vrot.slane %v569, %v600
    %v602 = vlaneseq
    %v603 = vshrl.u32 %v602, 7
    %v604 = vsub.s32 2, %v603
    %v605 = vrot.slane %v569, %v604
    %v609 = vmul.f32 %v590, %v597
    %v610 = vmul.f32 %v591, %v601
    %v611 = vmul.f32 %v592, %v605
    %v613 = vlaneseq
    %v614 = vshrl.u32 %v613, 7
    %v615 = vsub.s32 0, %v614
    %v616 = vrot.slane %v570, %v615
    %v617 = vlaneseq
    %v618 = vshrl.u32 %v617, 7
    %v619 = vsub.s32 1, %v618
    %v620 = vrot.slane %v570, %v619
    %v621 = vlaneseq
    %v622 = vshrl.u32 %v621, 7
    %v623 = vsub.s32 2, %v622
    %v624 = vrot.slane %v570, %v623
    %v628 = vadd.f32 %v609, %v616
    %v629 = vadd.f32 %v610, %v620
    %v630 = vadd.f32 %v611, %v624
    %631 = vst [vmem:[#allocation8] sm:$0xff] %v628
    %632 = vst [vmem:[#allocation8 + $0x8] sm:$0xff] %v629
    %633 = vst [vmem:[#allocation8 + $0x10] sm:$0xff] %v630
    // Predicated region
    $region66: #{clinical_prior_encoder.1} parent=1 // pred_check
      _
    $region67: #{clinical_prior_encoder.1} parent=1 // pred_check_branch
      %635 = sbr.rel (0) target = $region69
    $region68: #{clinical_prior_encoder.1} parent=1 // pred_region
      %s637 = ssub.s32 384, 384
      %638 = vsyncadd [#allocation4], %s637
      %s640 = sshll.u32 [#allocation8], 4
      %s641 = int_to_ptr.vmem [resolvable:$true] %s640
      %643 = dma.vmem_to_hbm [thread:$0]  %s641, 384, %s13, [#allocation4]
    $region69: #{clinical_prior_encoder.1} parent=1 // pred_fallthru
      _
    // Predicated region
    $region70: #{clinical_prior_encoder.1} parent=1 // pred_check
      _
    $region71: #{clinical_prior_encoder.1} parent=1 // pred_check_branch
      %645 = sbr.rel (0) target = $region73
    $region72: #{clinical_prior_encoder.1} parent=1 // pred_region
      %646 = dma.done [#allocation4], 384
    $region73: #{clinical_prior_encoder.1} parent=1 // pred_fallthru
      _
    %647 = vsyncpa [#allocation3], 1
    %648 = vsyncpa [#allocation6], 1
    %649 = vsyncpa [#allocation4], 1

</llo_original>
